<compile_context>
chip_gen: v7x
topology: tpu7x:2x2x1
jax: 0.10.0
libtpu: 0.0.40
codegen_flags: <defaults>
</compile_context>

<pallas_src>
import jax
import jax.numpy as jnp
from jax import lax
from jax.experimental import pallas as pl
from jax.experimental.pallas import tpu as pltpu

QUANT_BITS = 8
QUANT_RANGE = float(2 ** (QUANT_BITS - 1))   # 128.0 (BitLinear.quantization_range)
LN_EPS = 1e-5                                # F.layer_norm default eps
ACT_EPS = 1e-5                               # BitLinear.eps (activation clamp)
W_EPS = 1e-7                                 # ste_weights eps


# --------------------------------------------------------------------------
# Pass 1: per-batch layer-norm stats + min/max (for the global absmax).
# Accumulates scalars into SMEM outputs across the row-tile grid axis.
# --------------------------------------------------------------------------
def _stats_kernel(x_ref, sum_ref, ssq_ref, mn_ref, mx_ref):
    b = pl.program_id(0)
    t = pl.program_id(1)
    x = x_ref[...].astype(jnp.float32)            # (TM, Din)

    s = jnp.sum(x)
    ss = jnp.sum(x * x)
    lo = jnp.min(x)
    hi = jnp.max(x)

    @pl.when(t == 0)
    def _():
        sum_ref[b] = s
        ssq_ref[b] = ss
        mn_ref[b] = lo
        mx_ref[b] = hi

    @pl.when(t > 0)
    def _():
        sum_ref[b] = sum_ref[b] + s
        ssq_ref[b] = ssq_ref[b] + ss
        mn_ref[b] = jnp.minimum(mn_ref[b], lo)
        mx_ref[b] = jnp.maximum(mx_ref[b], hi)


# --------------------------------------------------------------------------
# Pass 2: normalize + quantize + two lane-dense matmuls + dequant + SiLU gate.
# --------------------------------------------------------------------------
def _glu_matmul_kernel(scale_ref, shift_ref, dq_ref, x_ref, wa_ref, wg_ref, o_ref):
    b = pl.program_id(0)

    x = x_ref[...].astype(jnp.float32)            # (TM, Din)
    # Folded layer-norm + activation quantization:  (x - mean)*rstd * 128/gamma
    xq = x * scale_ref[b] + shift_ref[b]
    xq = jnp.clip(xq, -QUANT_RANGE + ACT_EPS, QUANT_RANGE - ACT_EPS)
    xq = xq.astype(jnp.bfloat16)                  # bf16 operands, f32 accumulate

    # Transposed-RHS contraction ('mk,nk->mn'): feeds the MXU with the
    # nn.Linear (Dout, Din) layout directly, never materializing W.T.
    dn = (((1,), (1,)), ((), ()))
    a = lax.dot_general(xq, wa_ref[...], dn, preferred_element_type=jnp.float32)
    g = lax.dot_general(xq, wg_ref[...], dn, preferred_element_type=jnp.float32)

    dq = dq_ref[0]                                # gamma * w_gamma / 128
    a = a * dq
    g = g * dq
    # SiLU via sigmoid (EUP slot); dequant + gating fused in one elementwise pass.
    o_ref[...] = (a * (g * jax.nn.sigmoid(g))).astype(o_ref.dtype)


def _pick_block_rows(S, requested=None):
    if requested is not None and 0 < requested <= S and S % requested == 0:
        return requested
    cap = min(512, S)
    for tm in range(cap, 0, -1):
        if S % tm == 0 and (tm % 8 == 0 or tm == S):
            return tm
    return S


def glu_forward(x, weight, *, block_rows=None):
    """x: (B, S, Din) activations; weight: (Dout, Din) BitLinear weight."""
    B, S, Din = x.shape
    Dout, Din_w = weight.shape
    assert Din == Din_w and Dout % 2 == 0
    half = Dout // 2
    out_dtype = x.dtype

    tm = _pick_block_rows(S, block_rows)
    T = S // tm

    # ---- Weight prep: hoisted out of the hot kernel (weight-only, cacheable).
    # TODO(synk): in a real model, cache w_a/w_gate/w_gamma across calls instead
    # of recomputing them from the f32 weight every forward.
    wf = weight.astype(jnp.float32)
    w_gamma = jnp.mean(jnp.abs(wf))
    w_bin = jnp.clip(jnp.round(wf / (w_gamma + W_EPS)), -1.0, 1.0)
    wa = w_bin[:half].astype(jnp.bfloat16)        # ternary -> exact in bf16
    wg = w_bin[half:].astype(jnp.bfloat16)

    # ---- Pass 1: tiled stats (Pallas), finished on tiny (B,) arrays in XLA.
    xsum, xssq, xmin, xmax = pl.pallas_call(
        _stats_kernel,
        out_shape=[jax.ShapeDtypeStruct((B,), jnp.float32)] * 4,
        grid=(B, T),
        in_specs=[pl.BlockSpec((None, tm, Din), lambda b, t: (b, t, 0))],
        out_specs=[pl.BlockSpec(memory_space=pltpu.MemorySpace.SMEM)] * 4,
        compiler_params=pltpu.CompilerParams(
            dimension_semantics=("arbitrary", "arbitrary")),
    )(x)

    n = jnp.float32(S * Din)
    mean = xsum / n
    var = jnp.maximum(xssq / n - mean * mean, 0.0)
    rstd = lax.rsqrt(var + LN_EPS)
    # max |x_n| over the whole tensor: max_b( max(max_b - mean_b, mean_b - min_b) * rstd_b )
    gamma = jnp.max(jnp.maximum(xmax - mean, mean - xmin) * rstd)
    gamma = jnp.maximum(gamma, 1e-12)             # guard all-constant input (NaN)

    qscale = QUANT_RANGE / gamma
    row_scale = (rstd * qscale).astype(jnp.float32)           # (B,)
    row_shift = (-mean * rstd * qscale).astype(jnp.float32)   # (B,)
    dq = jnp.reshape(gamma * w_gamma / QUANT_RANGE, (1,)).astype(jnp.float32)

    # ---- Pass 2: quant + matmul + GLU (tiled, pipelined, megacore-parallel).
    x_bytes = x.size * x.dtype.itemsize
    w_bytes = 2 * half * Din * 2                   # two bf16 weight halves
    o_bytes = B * S * half * jnp.dtype(out_dtype).itemsize
    cost = pl.CostEstimate(flops=2 * B * S * Din * Dout,
                           transcendentals=B * S * half,
                           bytes_accessed=int(x_bytes + w_bytes + o_bytes))

    vmem_need = (2 * tm * Din * x.dtype.itemsize          # x tiles (dbl buffered)
                 + 2 * tm * half * jnp.dtype(out_dtype).itemsize
                 + 2 * w_bytes)                            # resident bf16 weights
    vmem_limit = int(min(max(4 * vmem_need, 16 * 1024 * 1024), 48 * 1024 * 1024))

    out = pl.pallas_call(
        _glu_matmul_kernel,
        out_shape=jax.ShapeDtypeStruct((B, S, half), out_dtype),
        grid=(B, T),
        in_specs=[
            pl.BlockSpec(memory_space=pltpu.MemorySpace.SMEM),   # row_scale (B,)
            pl.BlockSpec(memory_space=pltpu.MemorySpace.SMEM),   # row_shift (B,)
            pl.BlockSpec(memory_space=pltpu.MemorySpace.SMEM),   # dq (1,)
            pl.BlockSpec((None, tm, Din), lambda b, t: (b, t, 0)),
            pl.BlockSpec((half, Din), lambda b, t: (0, 0)),      # w_a resident
            pl.BlockSpec((half, Din), lambda b, t: (0, 0)),      # w_gate resident
        ],
        out_specs=pl.BlockSpec((None, tm, half), lambda b, t: (b, t, 0)),
        compiler_params=pltpu.CompilerParams(
            dimension_semantics=("parallel", "parallel"),
            vmem_limit_bytes=vmem_limit),
        cost_estimate=cost,
    )(row_scale, row_shift, dq, x, wa, wg)
    return out


def glu_reference(x, weight):
    """Pure-JAX f32 reference matching the PyTorch module."""
    x = x.astype(jnp.float32)
    w = weight.astype(jnp.float32)
    mean = jnp.mean(x, axis=(1, 2), keepdims=True)
    var = jnp.mean((x - mean) ** 2, axis=(1, 2), keepdims=True)
    xn = (x - mean) / jnp.sqrt(var + LN_EPS)
    input_gamma = jnp.max(jnp.abs(xn))
    w_gamma = jnp.mean(jnp.abs(w))
    w_bin = jnp.clip(jnp.round(w / (w_gamma + W_EPS)), -1.0, 1.0)
    xq = jnp.clip(xn * QUANT_RANGE / input_gamma,
                  -QUANT_RANGE + ACT_EPS, QUANT_RANGE - ACT_EPS)
    y = jnp.einsum("bsd,od->bso", xq, w_bin)
    y = y * input_gamma * w_gamma / QUANT_RANGE
    half = y.shape[-1] // 2
    a, gate = y[..., :half], y[..., half:]
    return a * jax.nn.silu(gate)


if __name__ == "__main__":
    key = jax.random.PRNGKey(0)
    kx, kw = jax.random.split(key)
    # GLU(dim_in=128, dim_out=256): proj -> 256 features, chunk(2) -> 128-wide
    # output (lane-dense, multiple of 128).
    B, S, DIM_IN, DIM_OUT = 2, 16, 128, 256

    x = jax.random.normal(kx, (B, S, DIM_IN), dtype=jnp.float32)
    bound = 1.0 / (DIM_IN ** 0.5)
    weight = jax.random.uniform(kw, (DIM_OUT, DIM_IN), jnp.float32, -bound, bound)

    out = glu_forward(x, weight, block_rows=8)   # grid = (2 batches, 2 row tiles)
    jax.block_until_ready(out)

    ref = glu_reference(x, weight)
    assert out.shape == (B, S, DIM_OUT // 2)
    rel_err = float(jnp.max(jnp.abs(out - ref)) / (jnp.max(jnp.abs(ref)) + 1e-12))
    # bf16 matmul operands (f32 accumulation) vs f32 reference -> ~0.5% error.
    assert rel_err < 2e-2, f"mismatch vs reference: rel_err={rel_err}"
    print("KERNEL_OK")
</pallas_src>

<mosaic_0001>
module attributes {stable_mosaic.version = 11 : i64} {
  func.func @_stats_kernel(%arg0: i32, %arg1: i32, %arg2: memref<1x8x128xf32, #tpu.memory_space<vmem>>, %arg3: memref<2xf32, #tpu.memory_space<smem>>, %arg4: memref<2xf32, #tpu.memory_space<smem>>, %arg5: memref<2xf32, #tpu.memory_space<smem>>, %arg6: memref<2xf32, #tpu.memory_space<smem>>) attributes {dimension_semantics = [#tpu.dimension_semantics<arbitrary>, #tpu.dimension_semantics<arbitrary>], iteration_bounds = array<i64: 2, 2>, scalar_prefetch = 0 : i64, scratch_operands = 0 : i64, tpu.core_type = #tpu.core_type<tc>, window_params = [{transform_indices = @transform_0, window_bounds = array<i64: 1, 8, 128>}, {transform_indices = @transform_1, window_bounds = array<i64: 2>}, {transform_indices = @transform_2, window_bounds = array<i64: 2>}, {transform_indices = @transform_3, window_bounds = array<i64: 2>}, {transform_indices = @transform_4, window_bounds = array<i64: 2>}]} {
    %c0 = arith.constant 0 : index
    %c0_0 = arith.constant 0 : index
    %c0_1 = arith.constant 0 : index
    %0 = vector.load %arg2[%c0, %c0_0, %c0_1] : memref<1x8x128xf32, #tpu.memory_space<vmem>>, vector<1x8x128xf32>
    %1 = vector.shape_cast %0 : vector<1x8x128xf32> to vector<8x128xf32>
    %2 = vector.shape_cast %1 : vector<8x128xf32> to vector<1x8x128xf32>
    %cst = arith.constant dense<0.000000e+00> : vector<1xf32>
    %3 = vector.multi_reduction <add>, %2, %cst [1, 2] : vector<1x8x128xf32> to vector<1xf32>
    %4 = vector.shape_cast %3 : vector<1xf32> to vector<1x1x1xf32>
    %5 = vector.extract %4[0, 0, 0] : f32 from vector<1x1x1xf32>
    %6 = arith.mulf %1, %1 : vector<8x128xf32>
    %7 = vector.shape_cast %6 : vector<8x128xf32> to vector<1x8x128xf32>
    %cst_2 = arith.constant dense<0.000000e+00> : vector<1xf32>
    %8 = vector.multi_reduction <add>, %7, %cst_2 [1, 2] : vector<1x8x128xf32> to vector<1xf32>
    %9 = vector.shape_cast %8 : vector<1xf32> to vector<1x1x1xf32>
    %10 = vector.extract %9[0, 0, 0] : f32 from vector<1x1x1xf32>
    %11 = vector.shape_cast %1 : vector<8x128xf32> to vector<1x8x128xf32>
    %cst_3 = arith.constant dense<0x7F800000> : vector<1xf32>
    %12 = vector.multi_reduction <minimumf>, %11, %cst_3 [1, 2] : vector<1x8x128xf32> to vector<1xf32>
    %13 = vector.shape_cast %12 : vector<1xf32> to vector<1x1x1xf32>
    %14 = vector.extract %13[0, 0, 0] : f32 from vector<1x1x1xf32>
    %15 = vector.shape_cast %1 : vector<8x128xf32> to vector<1x8x128xf32>
    %cst_4 = arith.constant dense<0xFF800000> : vector<1xf32>
    %16 = vector.multi_reduction <maximumf>, %15, %cst_4 [1, 2] : vector<1x8x128xf32> to vector<1xf32>
    %17 = vector.shape_cast %16 : vector<1xf32> to vector<1x1x1xf32>
    %18 = vector.extract %17[0, 0, 0] : f32 from vector<1x1x1xf32>
    %c0_i32 = arith.constant 0 : i32
    %19 = arith.cmpi eq, %arg1, %c0_i32 : i32
    %20 = arith.extui %19 : i1 to i32
    %c0_i32_5 = arith.constant 0 : i32
    %21 = arith.cmpi ne, %20, %c0_i32_5 : i32
    scf.if %21 {
      %25 = arith.index_cast %arg0 : i32 to index
      %26 = memref.load %arg3[%25] : memref<2xf32, #tpu.memory_space<smem>>
      memref.store %5, %arg3[%25] : memref<2xf32, #tpu.memory_space<smem>>
      %27 = arith.index_cast %arg0 : i32 to index
      %28 = memref.load %arg4[%27] : memref<2xf32, #tpu.memory_space<smem>>
      memref.store %10, %arg4[%27] : memref<2xf32, #tpu.memory_space<smem>>
      %29 = arith.index_cast %arg0 : i32 to index
      %30 = memref.load %arg5[%29] : memref<2xf32, #tpu.memory_space<smem>>
      memref.store %14, %arg5[%29] : memref<2xf32, #tpu.memory_space<smem>>
      %31 = arith.index_cast %arg0 : i32 to index
      %32 = memref.load %arg6[%31] : memref<2xf32, #tpu.memory_space<smem>>
      memref.store %18, %arg6[%31] : memref<2xf32, #tpu.memory_space<smem>>
    } else {
    }
    %c0_i32_6 = arith.constant 0 : i32
    %22 = arith.cmpi sgt, %arg1, %c0_i32_6 : i32
    %23 = arith.extui %22 : i1 to i32
    %c0_i32_7 = arith.constant 0 : i32
    %24 = arith.cmpi ne, %23, %c0_i32_7 : i32
    scf.if %24 {
      %25 = arith.index_cast %arg0 : i32 to index
      %26 = memref.load %arg3[%25] : memref<2xf32, #tpu.memory_space<smem>>
      %27 = arith.addf %26, %5 : f32
      %28 = arith.index_cast %arg0 : i32 to index
      %29 = memref.load %arg3[%28] : memref<2xf32, #tpu.memory_space<smem>>
      memref.store %27, %arg3[%28] : memref<2xf32, #tpu.memory_space<smem>>
      %30 = arith.index_cast %arg0 : i32 to index
      %31 = memref.load %arg4[%30] : memref<2xf32, #tpu.memory_space<smem>>
      %32 = arith.addf %31, %10 : f32
      %33 = arith.index_cast %arg0 : i32 to index
      %34 = memref.load %arg4[%33] : memref<2xf32, #tpu.memory_space<smem>>
      memref.store %32, %arg4[%33] : memref<2xf32, #tpu.memory_space<smem>>
      %35 = arith.index_cast %arg0 : i32 to index
      %36 = memref.load %arg5[%35] : memref<2xf32, #tpu.memory_space<smem>>
      %37 = arith.minimumf %36, %14 : f32
      %38 = arith.index_cast %arg0 : i32 to index
      %39 = memref.load %arg5[%38] : memref<2xf32, #tpu.memory_space<smem>>
      memref.store %37, %arg5[%38] : memref<2xf32, #tpu.memory_space<smem>>
      %40 = arith.index_cast %arg0 : i32 to index
      %41 = memref.load %arg6[%40] : memref<2xf32, #tpu.memory_space<smem>>
      %42 = arith.maximumf %41, %18 : f32
      %43 = arith.index_cast %arg0 : i32 to index
      %44 = memref.load %arg6[%43] : memref<2xf32, #tpu.memory_space<smem>>
      memref.store %42, %arg6[%43] : memref<2xf32, #tpu.memory_space<smem>>
    } else {
    }
    return
  }
  func.func @transform_0(%arg0: i32, %arg1: i32) -> (i32, i32, i32) {
    %c0_i32 = arith.constant 0 : i32
    %c0_i32_0 = arith.constant 0 : i32
    return %arg0, %arg1, %c0_i32 : i32, i32, i32
  }
  func.func @transform_1(%arg0: i32, %arg1: i32) -> i32 {
    %c0_i32 = arith.constant 0 : i32
    %c0_i32_0 = arith.constant 0 : i32
    return %c0_i32 : i32
  }
  func.func @transform_2(%arg0: i32, %arg1: i32) -> i32 {
    %c0_i32 = arith.constant 0 : i32
    %c0_i32_0 = arith.constant 0 : i32
    return %c0_i32 : i32
  }
  func.func @transform_3(%arg0: i32, %arg1: i32) -> i32 {
    %c0_i32 = arith.constant 0 : i32
    %c0_i32_0 = arith.constant 0 : i32
    return %c0_i32 : i32
  }
  func.func @transform_4(%arg0: i32, %arg1: i32) -> i32 {
    %c0_i32 = arith.constant 0 : i32
    %c0_i32_0 = arith.constant 0 : i32
    return %c0_i32 : i32
  }
}

</mosaic_0001>

<llo_original>
// kernel: tpu_custom_call.1
$region0: #{tpu_custom_call.1}
  #allocation0 [shape = 'u32[]', space=smem, size = 0x4, offset = 0x4, fixed_abs, tag = 'smem constant byte address 0x4 - core index']
  #allocation1 [shape = 'u32[144,128]{1,0:T(1,128)}', space=vmem, size = 0x12000, scoped, tag = 'internal scratch']
  %s0 = inlined_call_operand.hbm [shape: f32[2,16,128], index: 0, kind: input, shape index: {}]
  %s1 = inlined_call_operand.hbm [shape: f32[2], index: 1, kind: output, shape index: {0}]
  %s2 = inlined_call_operand.hbm [shape: f32[2], index: 2, kind: output, shape index: {1}]
  %s3 = inlined_call_operand.hbm [shape: f32[2], index: 3, kind: output, shape index: {2}]
  %s4 = inlined_call_operand.hbm [shape: f32[2], index: 4, kind: output, shape index: {3}]
  %5 = xla_tuple %s1, %s2, %s3, %s4
  %s6 = sld [smem:[#allocation0]]
  $region73: #{tpu_custom_call.1} parent=0
    _
  %s8 = ssub.s32 1, %s6
  %s9 = scalar_select 0, %s8, %s6
  $region1: #{tpu_custom_call.1} parent=0
    #allocation2 [shape = 'u8[8192]{0}', space=vmem, size = 0x2000, scoped, tag = 'input window, operand 0']
    #allocation3 [shape = 's32[2]{0}', space=sflag, size = 0x8, scoped, tag = 'scoped memory for tpu_custom_call.1']
    #allocation4 [shape = 's32[2]{0}', space=sflag, size = 0x8, scoped, tag = 'scoped memory for tpu_custom_call.1']
    #allocation5 [shape = 'u8[512]{0}', space=smem, size = 0x200, scoped, tag = 'output window, operand 0, single buffered']
    #allocation6 [shape = 'u8[512]{0}', space=smem, size = 0x200, scoped, tag = 'output window, operand 1, single buffered']
    #allocation7 [shape = 's32[1]{0}', space=sflag, size = 0x4, scoped, tag = 'scoped memory for tpu_custom_call.1']
    #allocation8 [shape = 'u8[512]{0}', space=smem, size = 0x200, scoped, tag = 'output window, operand 2, single buffered']
    #allocation9 [shape = 'u8[512]{0}', space=smem, size = 0x200, scoped, tag = 'output window, operand 3, single buffered']
    #allocation10 [shape = 's32[1]{0}', space=sflag, size = 0x4, scoped, tag = 'scoped memory for tpu_custom_call.1']
    %10 = vsyncpa [#allocation3], 0
    %s11 = scalar_lea.sflag [#allocation3], 1
    %12 = vsyncpa %s11, 0
    %13 = vsyncpa [#allocation4], 0
    %14 = vsyncpa [#allocation7], 0
    %15 = vsyncpa [#allocation10], 0
    loop: start=0, step=1, limit=6
    $region2: #{tpu_custom_call.1} parent=1 // loop_pre_header
      _
    $region3: #{tpu_custom_call.1} parent=1 // loop_header
      %s17 = sphi 0, %s21
      %p18 = scmp.ge.s32.totalorder %s17, 6
      %s24 = sphi 0, %s36
      %s25 = sphi 0, %s32
      %s26 = sphi 0, %s24
      %s27 = sphi 0, %s25
      %s28 = sphi 0, %s26
      %s29 = sphi 0, %s27
      %s41 = sphi 0, %s43
      %s44 = sphi 0, %s41
      %s45 = sphi 0, %s44
      %s61 = sphi 0, %s45
      %s65 = sphi 0, %s65
      %s67 = sphi 0, %s65
      %s68 = sphi 0, %s67
      %s82 = sphi 0, %s68
      %s86 = sphi 0, %s86
      %s88 = sphi 0, %s86
      %s89 = sphi 0, %s88
      %s103 = sphi 0, %s89
      %s107 = sphi 0, %s107
      %s109 = sphi 0, %s107
      %s110 = sphi 0, %s109
      %s124 = sphi 0, %s110
      %s128 = sphi 0, %s128
      %s130 = sphi 0, %s128
      %s131 = sphi 0, %s130
      %s145 = sphi 0, %s131
    $region4: #{tpu_custom_call.1} parent=1 // loop_header_branch
      %20 = sbr.rel (%p18) target = $region8
    $region5: #{tpu_custom_call.1} parent=1 // loop_body
      %s22 = ssub.s32 %s17, 1
      %s23 = ssub.s32 %s17, 2
      %s30 = sadd.s32 1, %s25
      %p31 = scmp.ge.s32.totalorder %s30, 2
      %s32 = scalar_select %p31, 0, %s30
      %s33 = sadd.s32 1, %s24
      %s34 = scalar_select %p31, %s33, %s24
      %p35 = scmp.ge.s32.totalorder %s34, 2
      %s36 = scalar_select %p35, 0, %s34
      %s37 = ssub.s32 %s24, %s36
      %s38 = ssub.s32 %s25, %s32
      %s39 = sor.u32 %s37, %s38
      %p40 = scmp.eq.s32.totalorder %s39, 0
      %s42 = sadd.s32 %s41, 1
      %s43 = scalar_select %p40, %s41, %s42
      %p46 = pneg %p40
      %p47 = scmp.eq.s32.totalorder %s17, 3
      %p48 = por %p46, %p47
      %p49 = scmp.ne.s32.totalorder %s41, %s44
      %p50 = scmp.eq.s32.totalorder %s17, 0
      %p51 = por %p49, %p50
      %p52 = scmp.ne.s32.totalorder %s41, %s44
      %p53 = scmp.eq.s32.totalorder %s22, 3
      %p54 = por %p52, %p53
      %p55 = scmp.ne.s32.totalorder %s44, %s45
      %p56 = scmp.eq.s32.totalorder %s22, 0
      %p57 = por %p55, %p56
      %p58 = scmp.ne.s32.totalorder %s44, %s45
      %p59 = scmp.eq.s32.totalorder %s23, 3
      %p60 = por %p58, %p59
      %p62 = scmp.ne.s32.totalorder %s45, %s61
      %p63 = scmp.eq.s32.totalorder %s23, 0
      %p64 = por %p62, %p63
      %s66 = sadd.s32 %s65, 1
      %p69 = scmp.eq.s32.totalorder %s17, 3
      %p70 = scmp.ne.s32.totalorder %s65, %s67
      %p71 = scmp.eq.s32.totalorder %s17, 0
      %p72 = por %p70, %p71
      %p73 = scmp.ne.s32.totalorder %s65, %s67
      %p74 = scmp.eq.s32.totalorder %s22, 3
      %p75 = por %p73, %p74
      %p76 = scmp.ne.s32.totalorder %s67, %s68
      %p77 = scmp.eq.s32.totalorder %s22, 0
      %p78 = por %p76, %p77
      %p79 = scmp.ne.s32.totalorder %s67, %s68
      %p80 = scmp.eq.s32.totalorder %s23, 3
      %p81 = por %p79, %p80
      %p83 = scmp.ne.s32.totalorder %s68, %s82
      %p84 = scmp.eq.s32.totalorder %s23, 0
      %p85 = por %p83, %p84
      %s87 = sadd.s32 %s86, 1
      %p90 = scmp.eq.s32.totalorder %s17, 3
      %p91 = scmp.ne.s32.totalorder %s86, %s88
      %p92 = scmp.eq.s32.totalorder %s17, 0
      %p93 = por %p91, %p92
      %p94 = scmp.ne.s32.totalorder %s86, %s88
      %p95 = scmp.eq.s32.totalorder %s22, 3
      %p96 = por %p94, %p95
      %p97 = scmp.ne.s32.totalorder %s88, %s89
      %p98 = scmp.eq.s32.totalorder %s22, 0
      %p99 = por %p97, %p98
      %p100 = scmp.ne.s32.totalorder %s88, %s89
      %p101 = scmp.eq.s32.totalorder %s23, 3
      %p102 = por %p100, %p101
      %p104 = scmp.ne.s32.totalorder %s89, %s103
      %p105 = scmp.eq.s32.totalorder %s23, 0
      %p106 = por %p104, %p105
      %s108 = sadd.s32 %s107, 1
      %p111 = scmp.eq.s32.totalorder %s17, 3
      %p112 = scmp.ne.s32.totalorder %s107, %s109
      %p113 = scmp.eq.s32.totalorder %s17, 0
      %p114 = por %p112, %p113
      %p115 = scmp.ne.s32.totalorder %s107, %s109
      %p116 = scmp.eq.s32.totalorder %s22, 3
      %p117 = por %p115, %p116
      %p118 = scmp.ne.s32.totalorder %s109, %s110
      %p119 = scmp.eq.s32.totalorder %s22, 0
      %p120 = por %p118, %p119
      %p121 = scmp.ne.s32.totalorder %s109, %s110
      %p122 = scmp.eq.s32.totalorder %s23, 3
      %p123 = por %p121, %p122
      %p125 = scmp.ne.s32.totalorder %s110, %s124
      %p126 = scmp.eq.s32.totalorder %s23, 0
      %p127 = por %p125, %p126
      %s129 = sadd.s32 %s128, 1
      %p132 = scmp.eq.s32.totalorder %s17, 3
      %p133 = scmp.ne.s32.totalorder %s128, %s130
      %p134 = scmp.eq.s32.totalorder %s17, 0
      %p135 = por %p133, %p134
      %p136 = scmp.ne.s32.totalorder %s128, %s130
      %p137 = scmp.eq.s32.totalorder %s22, 3
      %p138 = por %p136, %p137
      %p139 = scmp.ne.s32.totalorder %s130, %s131
      %p140 = scmp.eq.s32.totalorder %s22, 0
      %p141 = por %p139, %p140
      %p142 = scmp.ne.s32.totalorder %s130, %s131
      %p143 = scmp.eq.s32.totalorder %s23, 3
      %p144 = por %p142, %p143
      %p146 = scmp.ne.s32.totalorder %s131, %s145
      %p147 = scmp.eq.s32.totalorder %s23, 0
      %p148 = por %p146, %p147
      %p149 = scmp.le.s32.totalorder 1, %s17
      %p150 = scmp.lt.s32.totalorder %s17, 5
      %p151 = pnand %p149, %p150
      %p152 = pneg %p151
      // Predicated region
      $region9: #{tpu_custom_call.1} parent=5 // pred_check
        _
      $region10: #{tpu_custom_call.1} parent=5 // pred_check_branch
        %154 = sbr.rel (%p151) target = $region12
      $region11: #{tpu_custom_call.1} parent=5 // pred_region
        %s155 = ssub.s32 %s17, 1
      $region12: #{tpu_custom_call.1} parent=5 // pred_fallthru
        _
      %p156 = scmp.lt.s32.totalorder %s17, 4
      // Predicated region
      $region13: #{tpu_custom_call.1} parent=5 // pred_check
        %p157 = pneg %p156
      $region14: #{tpu_custom_call.1} parent=5 // pred_check_branch
        %159 = sbr.rel (%p157) target = $region16
      $region15: #{tpu_custom_call.1} parent=5 // pred_region
        // Predicated region
        $region17: #{tpu_custom_call.1} parent=15 // pred_check
          %p160 = pneg %p51
        $region18: #{tpu_custom_call.1} parent=15 // pred_check_branch
          %162 = sbr.rel (%p160) target = $region20
        $region19: #{tpu_custom_call.1} parent=15 // pred_region
          %s163 = sand.u32 %s41, 1
          %s164 = scalar_lea.sflag [#allocation3], %s163
          %s165 = sand.u32 %s41, 1
          %s166 = smul.addr %s165, 8
          %s167 = scalar_lea.vmem [#allocation2], %s166
          %s169 = ssub.s32 128, 128
          %170 = vsyncadd %s164, %s169
          %s171 = smul.addr %s24, 2
          %s172 = sadd.s32 %s25, %s171
          %s173 = smul.addr %s172, 128
          %s174 = scalar_lea.hbm %s0, %s173
          %s176 = sshll.u32 %s167, 4
          %s177 = int_to_ptr.vmem [resolvable:$true] %s176
          %179 = dma.hbm_to_vmem [thread:$0]  %s174, 128, %s177, %s164
        $region20: #{tpu_custom_call.1} parent=15 // pred_fallthru
          _
      $region16: #{tpu_custom_call.1} parent=5 // pred_fallthru
        _
      %p180 = scmp.le.s32.totalorder 1, %s17
      %p181 = scmp.lt.s32.totalorder %s17, 5
      %p182 = pnand %p180, %p181
      %p183 = pneg %p182
      // Predicated region
      $region21: #{tpu_custom_call.1} parent=5 // pred_check
        _
      $region22: #{tpu_custom_call.1} parent=5 // pred_check_branch
        %185 = sbr.rel (%p182) target = $region24
      $region23: #{tpu_custom_call.1} parent=5 // pred_region
        %s186 = ssub.s32 %s17, 1
        %s187 = sand.u32 %s44, 1
        %s188 = scalar_lea.sflag [#allocation3], %s187
        %s189 = sand.u32 %s44, 1
        %s190 = smul.addr %s189, 8
        %s191 = scalar_lea.vmem [#allocation2], %s190
        // Predicated region
        $region25: #{tpu_custom_call.1} parent=23 // pred_check
          %p192 = pneg %p57
        $region26: #{tpu_custom_call.1} parent=23 // pred_check_branch
          %194 = sbr.rel (%p192) target = $region28
        $region27: #{tpu_custom_call.1} parent=23 // pred_region
          %195 = dma.done %s188, 128
        $region28: #{tpu_custom_call.1} parent=23 // pred_fallthru
          _
        %s196 = sand.u32 %s44, 1
        %s197 = scalar_lea.sflag [#allocation3], %s196
        %s198 = sand.u32 %s44, 1
        %s199 = smul.addr %s198, 8
        %s200 = scalar_lea.vmem [#allocation2], %s199
        %p201 = pneg %p57
        %p202 = pneg %p54
        %p203 = pneg %p78
        %p204 = pneg %p75
        %p205 = pneg %p99
        %p206 = pneg %p96
        %p207 = pneg %p120
        %p208 = pneg %p117
        %p209 = pneg %p141
        %p210 = pneg %p138
        %v211 = vld [vmem:[%s191] sm:$0xff]
        %212 = vadd.xlane.f32.xlu0 %v211
        %v213 = vpop.xlane.xlu0 %212
        %v214 = vrot.slane %v213, 4
        %v215 = vadd.f32 %v213, %v214
        %v216 = vrot.slane %v215, 2
        %v217 = vadd.f32 %v215, %v216
        %v218 = vrot.slane %v217, 1
        %v219 = vadd.f32 %v217, %v218
        %s220 = vtos %v219
        %v221 = vmul.f32 %v211, %v211
        %222 = vadd.xlane.f32.xlu0 %v221
        %v223 = vpop.xlane.xlu0 %222
        %v224 = vrot.slane %v223, 4
        %v225 = vadd.f32 %v223, %v224
        %v226 = vrot.slane %v225, 2
        %v227 = vadd.f32 %v225, %v226
        %v228 = vrot.slane %v227, 1
        %v229 = vadd.f32 %v227, %v228
        %s230 = vtos %v229
        %231 = vmin.xlane.f32.xlu0 %v211
        %v232 = vpop.xlane.xlu0 %231
        %v233 = vrot.slane %v232, 4
        %v234 = vmin.f32 %v232, %v233
        %v235 = vrot.slane %v234, 2
        %v236 = vmin.f32 %v234, %v235
        %v237 = vrot.slane %v236, 1
        %v238 = vmin.f32 %v236, %v237
        %s239 = vtos %v238
        %240 = vmax.xlane.f32.xlu0 %v211
        %v241 = vpop.xlane.xlu0 %240
        %v242 = vrot.slane %v241, 4
        %v243 = vmax.f32 %v241, %v242
        %v244 = vrot.slane %v243, 2
        %v245 = vmax.f32 %v243, %v244
        %v246 = vrot.slane %v245, 1
        %v247 = vmax.f32 %v245, %v246
        %s248 = vtos %v247
        %p249 = scmp.eq.s32.totalorder %s27, 0
        // Predicated region
        $region29: #{tpu_custom_call.1} parent=23 // pred_check
          %p250 = pneg %p249
        $region30: #{tpu_custom_call.1} parent=23 // pred_check_branch
          %252 = sbr.rel (%p250) target = $region32
        $region31: #{tpu_custom_call.1} parent=23 // pred_region
          %s253 = scalar_lea.smem [#allocation5], %s26
          %254 = sst [smem:[%s253]] %s220
          %s255 = scalar_lea.smem [#allocation6], %s26
          %256 = sst [smem:[%s255]] %s230
          %s257 = scalar_lea.smem [#allocation8], %s26
          %258 = sst [smem:[%s257]] %s239
          %s259 = scalar_lea.smem [#allocation9], %s26
          %260 = sst [smem:[%s259]] %s248
        $region32: #{tpu_custom_call.1} parent=23 // pred_fallthru
          _
        %p261 = scmp.gt.s32.totalorder %s27, 0
        // Predicated region
        $region33: #{tpu_custom_call.1} parent=23 // pred_check
          %p262 = pneg %p261
        $region34: #{tpu_custom_call.1} parent=23 // pred_check_branch
          %264 = sbr.rel (%p262) target = $region36
        $region35: #{tpu_custom_call.1} parent=23 // pred_region
          %s265 = sld [smem:[#allocation5 + %s26]]
          %s266 = sadd.f32 %s265, %s220
          %s267 = scalar_lea.smem [#allocation5], %s26
          %268 = sst [smem:[%s267]] %s266
          %s269 = sld [smem:[#allocation6 + %s26]]
          %s270 = sadd.f32 %s269, %s230
          %s271 = scalar_lea.smem [#allocation6], %s26
          %272 = sst [smem:[%s271]] %s270
          %s273 = sld [smem:[#allocation8 + %s26]]
          %s274 = smin.f32 %s273, %s239
          %s275 = scalar_lea.smem [#allocation8], %s26
          %276 = sst [smem:[%s275]] %s274
          %s277 = sld [smem:[#allocation9 + %s26]]
          %s278 = smax.f32 %s277, %s248
          %s279 = scalar_lea.smem [#allocation9], %s26
          %280 = sst [smem:[%s279]] %s278
        $region36: #{tpu_custom_call.1} parent=23 // pred_fallthru
          _
        // Predicated region
        $region37: #{tpu_custom_call.1} parent=23 // pred_check
          %p281 = pneg %p75
        $region38: #{tpu_custom_call.1} parent=23 // pred_check_branch
          %283 = sbr.rel (%p281) target = $region40
        $region39: #{tpu_custom_call.1} parent=23 // pred_region
          %s285 = ssub.s32 16, 16
          %286 = vsyncadd [#allocation4], %s285
          %289 = dma.smem_to_hbm [#allocation5], 16, %s1, [#allocation4]
        $region40: #{tpu_custom_call.1} parent=23 // pred_fallthru
          _
        // Predicated region
        $region41: #{tpu_custom_call.1} parent=23 // pred_check
          %p290 = pneg %p96
        $region42: #{tpu_custom_call.1} parent=23 // pred_check_branch
          %292 = sbr.rel (%p290) target = $region44
        $region43: #{tpu_custom_call.1} parent=23 // pred_region
          %s294 = ssub.s32 16, 16
          %295 = vsyncadd [#allocation7], %s294
          %298 = dma.smem_to_hbm [#allocation6], 16, %s2, [#allocation7]
        $region44: #{tpu_custom_call.1} parent=23 // pred_fallthru
          _
        // Predicated region
        $region45: #{tpu_custom_call.1} parent=23 // pred_check
          %p299 = pneg %p117
        $region46: #{tpu_custom_call.1} parent=23 // pred_check_branch
          %301 = sbr.rel (%p299) target = $region48
        $region47: #{tpu_custom_call.1} parent=23 // pred_region
          %s303 = ssub.s32 16, 16
          %304 = vsyncadd [#allocation7], %s303
          %307 = dma.smem_to_hbm [#allocation8], 16, %s3, [#allocation7]
        $region48: #{tpu_custom_call.1} parent=23 // pred_fallthru
          _
        // Predicated region
        $region49: #{tpu_custom_call.1} parent=23 // pred_check
          %p308 = pneg %p138
        $region50: #{tpu_custom_call.1} parent=23 // pred_check_branch
          %310 = sbr.rel (%p308) target = $region52
        $region51: #{tpu_custom_call.1} parent=23 // pred_region
          %s312 = ssub.s32 16, 16
          %313 = vsyncadd [#allocation10], %s312
          %316 = dma.smem_to_hbm [#allocation9], 16, %s4, [#allocation10]
        $region52: #{tpu_custom_call.1} parent=23 // pred_fallthru
          _
        // Predicated region
        $region53: #{tpu_custom_call.1} parent=23 // pred_check
          %p317 = pneg %p75
        $region54: #{tpu_custom_call.1} parent=23 // pred_check_branch
          %319 = sbr.rel (%p317) target = $region56
        $region55: #{tpu_custom_call.1} parent=23 // pred_region
          %320 = dma.done [#allocation4], 16
        $region56: #{tpu_custom_call.1} parent=23 // pred_fallthru
          _
        // Predicated region
        $region57: #{tpu_custom_call.1} parent=23 // pred_check
          %p321 = pneg %p96
        $region58: #{tpu_custom_call.1} parent=23 // pred_check_branch
          %323 = sbr.rel (%p321) target = $region60
        $region59: #{tpu_custom_call.1} parent=23 // pred_region
          %324 = dma.done [#allocation7], 16
        $region60: #{tpu_custom_call.1} parent=23 // pred_fallthru
          _
        // Predicated region
        $region61: #{tpu_custom_call.1} parent=23 // pred_check
          %p325 = pneg %p117
        $region62: #{tpu_custom_call.1} parent=23 // pred_check_branch
          %327 = sbr.rel (%p325) target = $region64
        $region63: #{tpu_custom_call.1} parent=23 // pred_region
          %328 = dma.done [#allocation7], 16
        $region64: #{tpu_custom_call.1} parent=23 // pred_fallthru
          _
        // Predicated region
        $region65: #{tpu_custom_call.1} parent=23 // pred_check
          %p329 = pneg %p138
        $region66: #{tpu_custom_call.1} parent=23 // pred_check_branch
          %331 = sbr.rel (%p329) target = $region68
        $region67: #{tpu_custom_call.1} parent=23 // pred_region
          %332 = dma.done [#allocation10], 16
        $region68: #{tpu_custom_call.1} parent=23 // pred_fallthru
          _
        %333 = sfence
      $region24: #{tpu_custom_call.1} parent=5 // pred_fallthru
        _
      %p334 = scmp.le.s32.totalorder 2, %s17
      // Predicated region
      $region69: #{tpu_custom_call.1} parent=5 // pred_check
        %p335 = pneg %p334
      $region70: #{tpu_custom_call.1} parent=5 // pred_check_branch
        %337 = sbr.rel (%p335) target = $region72
      $region71: #{tpu_custom_call.1} parent=5 // pred_region
        %s338 = ssub.s32 %s17, 2
      $region72: #{tpu_custom_call.1} parent=5 // pred_fallthru
        _
    $region6: #{tpu_custom_call.1} parent=1 // loop_footer
      %s21 = sadd.s32 1, %s17
    $region7: #{tpu_custom_call.1} parent=1 // loop_footer_branch
      %16 = sbr.rel target = $region3
    $region8: #{tpu_custom_call.1} parent=1 // loop_exit
      _
    %339 = vsyncpa [#allocation3], 1
    %s340 = scalar_lea.sflag [#allocation3], 1
    %341 = vsyncpa %s340, 1
    %342 = vsyncpa [#allocation4], 1
    %s343 = scalar_lea.sflag [#allocation4], 1
    %344 = vsyncpa %s343, 1
    %345 = vsyncpa [#allocation7], 1
    %346 = vsyncpa [#allocation10], 1

</llo_original>
